<compile_context>
chip_gen: v7x
topology: tpu7x:2x2x1
jax: 0.10.0
libtpu: 0.0.40
codegen_flags: <defaults>
</compile_context>

<pallas_src>
import jax
import jax.numpy as jnp
from jax import lax
from jax.experimental import pallas as pl


# ---------------------------------------------------------------------------
# Fused kernel: conv1+bn1+relu -> conv2+bn2+residual+relu, whole batch per step
# ---------------------------------------------------------------------------
def _make_kernel(N, H, WC):
    NH = N * H

    def kernel(xim_ref, m1_ref, b1_ref, m2_ref, b2_ref, o_ref):
        """xim_ref: (N*H, 3*WC) bf16 im2row slab of x (dy=0|1|2 blocks along lanes;
        centre block == x, reused as the residual).
        m1_ref/m2_ref: (3*WC, WC) bf16 block-Toeplitz conv weights, BN scale folded.
        b1_ref/b2_ref: (1, WC) f32 folded BN bias tiled over W.
        o_ref: (N*H, WC) f32 output slab."""
        xim = xim_ref[...]                                        # (NH, 3*WC) bf16

        # --- conv1 + bn1 (scale folded) + relu : one K=3*WC matmul, M = N*H ----
        acc1 = jnp.dot(xim, m1_ref[...], preferred_element_type=jnp.float32)
        y1 = jnp.maximum(acc1 + b1_ref[...], 0.0)                 # (NH, WC) f32

        # --- conv2 H-halo built in vregs (no VMEM scratch round-trip) ----------
        # down[g] = y1[g-1], up[g] = y1[g+1]; zero the rows that would cross a
        # sample boundary (local h == 0 for the dy=0 tap, h == H-1 for dy=2).
        hloc = lax.broadcasted_iota(jnp.int32, (NH, WC), 0) % H
        zrow = jnp.zeros((1, WC), jnp.float32)
        down = jnp.concatenate([zrow, y1[:NH - 1, :]], axis=0)    # (NH, WC)
        up = jnp.concatenate([y1[1:, :], zrow], axis=0)           # (NH, WC)
        top = jnp.where(hloc == 0, 0.0, down)                     # dy = 0 tap rows
        bot = jnp.where(hloc == H - 1, 0.0, up)                   # dy = 2 tap rows
        x2 = jnp.concatenate([top, y1, bot], axis=1).astype(jnp.bfloat16)  # (NH, 3*WC)

        # --- conv2 + bn2 + residual + relu : one K=3*WC matmul ------------------
        acc2 = jnp.dot(x2, m2_ref[...], preferred_element_type=jnp.float32)
        res = xim[:, WC:2 * WC].astype(jnp.float32)               # residual == x
        o_ref[...] = jnp.maximum(acc2 + b2_ref[...] + res, 0.0)

    return kernel


# ---------------------------------------------------------------------------
# Wrapper: layout, BN folding, block-Toeplitz weight construction (plain JAX)
# ---------------------------------------------------------------------------
def _build_toeplitz(w_torch, scale, W):
    """torch conv weight (Cout, Cin, 3, 3) + folded BN scale (Cout,) ->
    (3, W*Cin, W*Cout) block-Toeplitz matrices; M[dy] maps a padded input row slab
    (W*Cin,) to an output row (W*Cout,), encoding dx shifts and W zero-padding."""
    w_eff = w_torch * scale[:, None, None, None]          # fold BN scale
    taps = jnp.transpose(w_eff, (2, 3, 1, 0))             # (dy, dx, Cin, Cout)
    Cin, Cout = taps.shape[2], taps.shape[3]
    # shifts[dx, w_in, w] = 1 iff w_in == w + dx - 1 (edges clipped => zero pad in W)
    shifts = jnp.stack(
        [jnp.eye(W, W, k=1 - dx, dtype=jnp.float32) for dx in range(3)])
    m = jnp.einsum("xab,yxio->yaibo", shifts, taps)       # (dy, w_in, Cin, w, Cout)
    return m.reshape(3, W * Cin, W * Cout)


def _fold_bn(gamma, beta, mean, var, eps=1e-5):
    scale = gamma / jnp.sqrt(var + eps)
    bias = beta - mean * scale
    return scale, bias


def basic_block_forward(x_nchw, params):
    """Inference forward of BasicBlock (stride=1, downsample=None, drop_prob=0)."""
    N, C, H, W = x_nchw.shape
    WC = W * C
    # Identity residual requires in_channels == out_channels and 3x3 kernels.
    assert params["conv1_w"].shape == (C, C, 3, 3), params["conv1_w"].shape
    assert params["conv2_w"].shape == (C, C, 3, 3), params["conv2_w"].shape
    # Lane-dense layout: W*C must be a multiple of 128 lanes.
    assert WC % 128 == 0, f"W*C = {WC} must be a multiple of 128"
    # Toeplitz weight VMEM guard (quadratic in W*C; matters at real ResNet widths).
    assert 2 * 3 * WC * WC * 2 < 16 * 1024 * 1024, "Toeplitz weights too large for VMEM"

    x = jnp.transpose(x_nchw, (0, 2, 3, 1)).astype(jnp.float32)   # NCHW -> NHWC
    x_slab = x.reshape(N, H, WC)                                  # lane-dense slab
    x_hpad = jnp.pad(x_slab, ((0, 0), (1, 1), (0, 0)))            # H zero-halo
    # im2row over dy: (N, H, 3*WC); centre block (lanes WC:2*WC) is x itself, so the
    # kernel reads the residual from this slab instead of a second input stream.
    xim = jnp.concatenate(
        [x_hpad[:, 0:H, :], x_hpad[:, 1:H + 1, :], x_hpad[:, 2:H + 2, :]], axis=-1)
    xim = xim.reshape(N * H, 3 * WC).astype(jnp.bfloat16)

    s1, b1 = _fold_bn(params["bn1_gamma"], params["bn1_beta"],
                      params["bn1_mean"], params["bn1_var"])
    s2, b2 = _fold_bn(params["bn2_gamma"], params["bn2_beta"],
                      params["bn2_mean"], params["bn2_var"])

    m1 = _build_toeplitz(params["conv1_w"], s1, W).reshape(3 * WC, WC)
    m2 = _build_toeplitz(params["conv2_w"], s2, W).reshape(3 * WC, WC)
    m1 = m1.astype(jnp.bfloat16)
    m2 = m2.astype(jnp.bfloat16)
    b1t = jnp.tile(b1, W)[None, :].astype(jnp.float32)            # (1, W*C)
    b2t = jnp.tile(b2, W)[None, :].astype(jnp.float32)

    NH = N * H
    flops = 2 * 2 * NH * (3 * WC) * WC                            # two K=3*WC matmuls
    bytes_accessed = (NH * 3 * WC * 2          # xim (bf16)
                      + 2 * 3 * WC * WC * 2    # m1 + m2 (bf16)
                      + 2 * WC * 4             # biases
                      + NH * WC * 4)           # output (f32)

    out = pl.pallas_call(
        _make_kernel(N, H, WC),
        out_shape=jax.ShapeDtypeStruct((NH, WC), jnp.float32),
        grid=(1,),   # whole batch in one step (toy N); block the batch for big N
        in_specs=[
            pl.BlockSpec((NH, 3 * WC), lambda i: (0, 0)),         # im2row slab
            pl.BlockSpec((3 * WC, WC), lambda i: (0, 0)),         # m1 (grid-invariant)
            pl.BlockSpec((1, WC), lambda i: (0, 0)),              # b1
            pl.BlockSpec((3 * WC, WC), lambda i: (0, 0)),         # m2
            pl.BlockSpec((1, WC), lambda i: (0, 0)),              # b2
        ],
        out_specs=pl.BlockSpec((NH, WC), lambda i: (0, 0)),
        cost_estimate=pl.CostEstimate(flops=flops, transcendentals=0,
                                      bytes_accessed=bytes_accessed),
    )(xim, m1, b1t, m2, b2t)

    out = out.reshape(N, H, W, C)
    return jnp.transpose(out, (0, 3, 1, 2))                       # back to NCHW


# ---------------------------------------------------------------------------
# Pure-JAX reference (for correctness check)
# ---------------------------------------------------------------------------
def _ref_conv_bn(x_nhwc, w_torch, gamma, beta, mean, var, eps=1e-5):
    w_hwio = jnp.transpose(w_torch, (2, 3, 1, 0))  # (kh, kw, Cin, Cout)
    y = lax.conv_general_dilated(
        x_nhwc, w_hwio, window_strides=(1, 1), padding=((1, 1), (1, 1)),
        dimension_numbers=("NHWC", "HWIO", "NHWC"))
    scale = gamma / jnp.sqrt(var + eps)
    bias = beta - mean * scale
    return y * scale + bias


def basic_block_reference(x_nchw, params):
    x = jnp.transpose(x_nchw, (0, 2, 3, 1)).astype(jnp.float32)
    out = jax.nn.relu(_ref_conv_bn(x, params["conv1_w"], params["bn1_gamma"],
                                   params["bn1_beta"], params["bn1_mean"],
                                   params["bn1_var"]))
    out = _ref_conv_bn(out, params["conv2_w"], params["bn2_gamma"],
                       params["bn2_beta"], params["bn2_mean"], params["bn2_var"])
    out = jax.nn.relu(out + x)
    return jnp.transpose(out, (0, 3, 1, 2))


# ---------------------------------------------------------------------------
# Main
# ---------------------------------------------------------------------------
if __name__ == "__main__":
    # in_channels == out_channels, stride=1 (identity residual); W*C = 128 lanes.
    N, C, H, W = 2, 8, 16, 16
    key = jax.random.PRNGKey(0)
    k = jax.random.split(key, 10)

    x = jax.random.normal(k[0], (N, C, H, W), jnp.float32)

    params = {
        "conv1_w": 0.2 * jax.random.normal(k[1], (C, C, 3, 3), jnp.float32),
        "conv2_w": 0.2 * jax.random.normal(k[2], (C, C, 3, 3), jnp.float32),
        "bn1_gamma": 1.0 + 0.1 * jax.random.normal(k[3], (C,), jnp.float32),
        "bn1_beta": 0.1 * jax.random.normal(k[4], (C,), jnp.float32),
        "bn1_mean": 0.1 * jax.random.normal(k[5], (C,), jnp.float32),
        "bn1_var": 0.5 + jnp.abs(jax.random.normal(k[6], (C,), jnp.float32)),
        "bn2_gamma": 1.0 + 0.1 * jax.random.normal(k[7], (C,), jnp.float32),
        "bn2_beta": 0.1 * jax.random.normal(k[8], (C,), jnp.float32),
        "bn2_mean": 0.1 * jax.random.normal(k[9], (C,), jnp.float32),
        "bn2_var": 0.5 + jnp.abs(jax.random.normal(k[0], (C,), jnp.float32)),
    }

    out = jax.block_until_ready(basic_block_forward(x, params))
    ref = jax.block_until_ready(basic_block_reference(x, params))

    assert out.shape == (N, C, H, W), out.shape
    # bf16 MXU operands (f32 accumulate/epilogue) => loosened tolerance vs f32 reference.
    assert jnp.allclose(out, ref, atol=1e-1, rtol=1e-2), float(
        jnp.max(jnp.abs(out - ref)))

    print("KERNEL_OK")
</pallas_src>

<mosaic_0001>
module attributes {stable_mosaic.version = 11 : i64} {
  func.func @kernel(%arg0: i32, %arg1: memref<32x384xbf16, #tpu.memory_space<vmem>>, %arg2: memref<384x128xbf16, #tpu.memory_space<vmem>>, %arg3: memref<1x128xf32, #tpu.memory_space<vmem>>, %arg4: memref<384x128xbf16, #tpu.memory_space<vmem>>, %arg5: memref<1x128xf32, #tpu.memory_space<vmem>>, %arg6: memref<32x128xf32, #tpu.memory_space<vmem>>) attributes {dimension_semantics = [#tpu.dimension_semantics<arbitrary>], iteration_bounds = array<i64: 1>, scalar_prefetch = 0 : i64, scratch_operands = 0 : i64, tpu.core_type = #tpu.core_type<tc>, window_params = [{pipeline_mode = #tpu.pipeline_mode<synchronous>, transform_indices = @transform_0, window_bounds = array<i64: 32, 384>}, {pipeline_mode = #tpu.pipeline_mode<synchronous>, transform_indices = @transform_1, window_bounds = array<i64: 384, 128>}, {pipeline_mode = #tpu.pipeline_mode<synchronous>, transform_indices = @transform_2, window_bounds = array<i64: 1, 128>}, {pipeline_mode = #tpu.pipeline_mode<synchronous>, transform_indices = @transform_3, window_bounds = array<i64: 384, 128>}, {pipeline_mode = #tpu.pipeline_mode<synchronous>, transform_indices = @transform_4, window_bounds = array<i64: 1, 128>}, {pipeline_mode = #tpu.pipeline_mode<synchronous>, transform_indices = @transform_5, window_bounds = array<i64: 32, 128>}]} {
    %c0 = arith.constant 0 : index
    %c0_0 = arith.constant 0 : index
    %0 = vector.load %arg1[%c0, %c0_0] : memref<32x384xbf16, #tpu.memory_space<vmem>>, vector<32x384xbf16>
    %c0_1 = arith.constant 0 : index
    %c0_2 = arith.constant 0 : index
    %1 = vector.load %arg2[%c0_1, %c0_2] : memref<384x128xbf16, #tpu.memory_space<vmem>>, vector<384x128xbf16>
    %cst = arith.constant dense<0.000000e+00> : vector<32x128xf32>
    %2 = tpu.matmul %0, %1, %cst {dimension_numbers = #tpu.dot_dimension_numbers<[1], [0], [0], [1], [0, 0, 1, 1], [], []>} : vector<32x384xbf16>, vector<384x128xbf16>, vector<32x128xf32> -> vector<32x128xf32>
    %c0_3 = arith.constant 0 : index
    %c0_4 = arith.constant 0 : index
    %3 = vector.load %arg3[%c0_3, %c0_4] : memref<1x128xf32, #tpu.memory_space<vmem>>, vector<1x128xf32>
    %4 = vector.broadcast %3 : vector<1x128xf32> to vector<32x128xf32>
    %5 = arith.addf %2, %4 : vector<32x128xf32>
    %cst_5 = arith.constant 0.000000e+00 : f32
    %6 = vector.broadcast %cst_5 : f32 to vector<32x128xf32>
    %7 = arith.maximumf %5, %6 : vector<32x128xf32>
    %8 = tpu.iota {dimensions = array<i32: 0>} : vector<32x128xi32>
    %c16_i32 = arith.constant 16 : i32
    %c0_i32 = arith.constant 0 : i32
    %9 = arith.cmpi eq, %c16_i32, %c0_i32 : i32
    %c1_i32 = arith.constant 1 : i32
    %10 = arith.select %9, %c1_i32, %c16_i32 : i32
    %11 = vector.broadcast %10 : i32 to vector<32x128xi32>
    %12 = arith.remsi %8, %11 : vector<32x128xi32>
    %c0_i32_6 = arith.constant 0 : i32
    %13 = vector.broadcast %c0_i32_6 : i32 to vector<32x128xi32>
    %14 = arith.cmpi ne, %12, %13 : vector<32x128xi32>
    %c0_i32_7 = arith.constant 0 : i32
    %15 = vector.broadcast %c0_i32_7 : i32 to vector<32x128xi32>
    %16 = arith.cmpi slt, %12, %15 : vector<32x128xi32>
    %c0_i32_8 = arith.constant 0 : i32
    %17 = arith.cmpi slt, %10, %c0_i32_8 : i32
    %18 = vector.broadcast %17 : i1 to vector<32x128xi1>
    %19 = vector.broadcast %18 : vector<32x128xi1> to vector<32x128xi1>
    %20 = arith.xori %16, %19 : vector<32x128xi1>
    %21 = arith.andi %20, %14 : vector<32x128xi1>
    %22 = vector.broadcast %10 : i32 to vector<32x128xi32>
    %23 = arith.addi %12, %22 : vector<32x128xi32>
    %24 = arith.select %21, %23, %12 : vector<32x128xi1>, vector<32x128xi32>
    %cst_9 = arith.constant 0.000000e+00 : f32
    %25 = vector.broadcast %cst_9 : f32 to vector<1x128xf32>
    %26 = vector.extract_strided_slice %7 {offsets = [0, 0], sizes = [31, 128], strides = [1, 1]} : vector<32x128xf32> to vector<31x128xf32>
    %27 = tpu.concatenate %25, %26 in 0 : vector<1x128xf32>, vector<31x128xf32> -> vector<32x128xf32>
    %28 = vector.extract_strided_slice %7 {offsets = [1, 0], sizes = [31, 128], strides = [1, 1]} : vector<32x128xf32> to vector<31x128xf32>
    %29 = tpu.concatenate %28, %25 in 0 : vector<31x128xf32>, vector<1x128xf32> -> vector<32x128xf32>
    %c0_i32_10 = arith.constant 0 : i32
    %30 = vector.broadcast %c0_i32_10 : i32 to vector<32x128xi32>
    %31 = arith.cmpi eq, %24, %30 : vector<32x128xi32>
    %cst_11 = arith.constant 0.000000e+00 : f32
    %32 = vector.broadcast %cst_11 : f32 to vector<32x128xf32>
    %33 = arith.select %31, %32, %27 : vector<32x128xi1>, vector<32x128xf32>
    %c15_i32 = arith.constant 15 : i32
    %34 = vector.broadcast %c15_i32 : i32 to vector<32x128xi32>
    %35 = arith.cmpi eq, %24, %34 : vector<32x128xi32>
    %cst_12 = arith.constant 0.000000e+00 : f32
    %36 = vector.broadcast %cst_12 : f32 to vector<32x128xf32>
    %37 = arith.select %35, %36, %29 : vector<32x128xi1>, vector<32x128xf32>
    %38 = tpu.concatenate %33, %7, %37 in 1 : vector<32x128xf32>, vector<32x128xf32>, vector<32x128xf32> -> vector<32x384xf32>
    %39 = arith.truncf %38 : vector<32x384xf32> to vector<32x384xbf16>
    %c0_13 = arith.constant 0 : index
    %c0_14 = arith.constant 0 : index
    %40 = vector.load %arg4[%c0_13, %c0_14] : memref<384x128xbf16, #tpu.memory_space<vmem>>, vector<384x128xbf16>
    %cst_15 = arith.constant dense<0.000000e+00> : vector<32x128xf32>
    %41 = tpu.matmul %39, %40, %cst_15 {dimension_numbers = #tpu.dot_dimension_numbers<[1], [0], [0], [1], [0, 0, 1, 1], [], []>} : vector<32x384xbf16>, vector<384x128xbf16>, vector<32x128xf32> -> vector<32x128xf32>
    %42 = vector.extract_strided_slice %0 {offsets = [0, 128], sizes = [32, 128], strides = [1, 1]} : vector<32x384xbf16> to vector<32x128xbf16>
    %43 = arith.extf %42 : vector<32x128xbf16> to vector<32x128xf32>
    %c0_16 = arith.constant 0 : index
    %c0_17 = arith.constant 0 : index
    %44 = vector.load %arg5[%c0_16, %c0_17] : memref<1x128xf32, #tpu.memory_space<vmem>>, vector<1x128xf32>
    %45 = vector.broadcast %44 : vector<1x128xf32> to vector<32x128xf32>
    %46 = arith.addf %41, %45 : vector<32x128xf32>
    %47 = arith.addf %46, %43 : vector<32x128xf32>
    %cst_18 = arith.constant 0.000000e+00 : f32
    %48 = vector.broadcast %cst_18 : f32 to vector<32x128xf32>
    %49 = arith.maximumf %47, %48 : vector<32x128xf32>
    %c0_19 = arith.constant 0 : index
    %c0_20 = arith.constant 0 : index
    %50 = vector.load %arg6[%c0_19, %c0_20] : memref<32x128xf32, #tpu.memory_space<vmem>>, vector<32x128xf32>
    tpu.vector_store %arg6[%c0_19, %c0_20], %49 {strides = array<i32>} : memref<32x128xf32, #tpu.memory_space<vmem>>, vector<32x128xf32>,
    return
  }
  func.func @transform_0(%arg0: i32) -> (i32, i32) {
    %c0_i32 = arith.constant 0 : i32
    %c0_i32_0 = arith.constant 0 : i32
    %c0_i32_1 = arith.constant 0 : i32
    return %c0_i32, %c0_i32_0 : i32, i32
  }
  func.func @transform_1(%arg0: i32) -> (i32, i32) {
    %c0_i32 = arith.constant 0 : i32
    %c0_i32_0 = arith.constant 0 : i32
    %c0_i32_1 = arith.constant 0 : i32
    return %c0_i32, %c0_i32_0 : i32, i32
  }
  func.func @transform_2(%arg0: i32) -> (i32, i32) {
    %c0_i32 = arith.constant 0 : i32
    %c0_i32_0 = arith.constant 0 : i32
    %c0_i32_1 = arith.constant 0 : i32
    return %c0_i32, %c0_i32_0 : i32, i32
  }
  func.func @transform_3(%arg0: i32) -> (i32, i32) {
    %c0_i32 = arith.constant 0 : i32
    %c0_i32_0 = arith.constant 0 : i32
    %c0_i32_1 = arith.constant 0 : i32
    return %c0_i32, %c0_i32_0 : i32, i32
  }
  func.func @transform_4(%arg0: i32) -> (i32, i32) {
    %c0_i32 = arith.constant 0 : i32
    %c0_i32_0 = arith.constant 0 : i32
    %c0_i32_1 = arith.constant 0 : i32
    return %c0_i32, %c0_i32_0 : i32, i32
  }
  func.func @transform_5(%arg0: i32) -> (i32, i32) {
    %c0_i32 = arith.constant 0 : i32
    %c0_i32_0 = arith.constant 0 : i32
    %c0_i32_1 = arith.constant 0 : i32
    return %c0_i32, %c0_i32_0 : i32, i32
  }
}

</mosaic_0001>

<llo_original>
// kernel: tpu_custom_call.1
$region0: #{tpu_custom_call.1}
  #allocation0 [shape = 'u32[]', space=smem, size = 0x4, offset = 0x4, fixed_abs, tag = 'smem constant byte address 0x4 - core index']
  #allocation1 [shape = 'u32[144,128]{1,0:T(1,128)}', space=vmem, size = 0x12000, scoped, tag = 'internal scratch']
  %s0 = inlined_call_operand.hbm [shape: bf16[32,384], index: 0, kind: input, shape index: {}]
  %s1 = inlined_call_operand.hbm [shape: bf16[384,128], index: 1, kind: input, shape index: {}]
  %s2 = inlined_call_operand.vmem [shape: f32[1,128], index: 2, kind: input, shape index: {}]
  %s3 = inlined_call_operand.hbm [shape: bf16[384,128], index: 3, kind: input, shape index: {}]
  %s4 = inlined_call_operand.vmem [shape: f32[1,128], index: 4, kind: input, shape index: {}]
  %s5 = inlined_call_operand.hbm [shape: f32[32,128], index: 5, kind: output, shape index: {}]
  %s6 = sld [smem:[#allocation0]]
  $region42: #{tpu_custom_call.1} parent=0
    _
  %s8 = ssub.s32 1, %s6
  %s9 = scalar_select 0, %s8, %s6
  $region1: #{tpu_custom_call.1} parent=0
    #allocation2 [shape = 'u8[24576]{0}', space=vmem, size = 0x6000, scoped, tag = 'input window, operand 0, single buffered']
    #allocation3 [shape = 's32[1]{0}', space=sflag, size = 0x4, scoped, tag = 'scoped memory for tpu_custom_call.1']
    #allocation4 [shape = 's32[1]{0}', space=sflag, size = 0x4, scoped, tag = 'scoped memory for tpu_custom_call.1']
    #allocation5 [shape = 'u8[98304]{0}', space=vmem, size = 0x18000, scoped, tag = 'input window, operand 1, single buffered']
    #allocation6 [shape = 's32[1]{0}', space=sflag, size = 0x4, scoped, tag = 'scoped memory for tpu_custom_call.1']
    #allocation7 [shape = 'u8[98304]{0}', space=vmem, size = 0x18000, scoped, tag = 'input window, operand 3, single buffered']
    #allocation8 [shape = 'u8[16384]{0}', space=vmem, size = 0x4000, scoped, tag = 'output window, operand 0, single buffered']
    %10 = vsyncpa [#allocation3], 0
    %11 = vsyncpa [#allocation6], 0
    %12 = vsyncpa [#allocation4], 0
    // Predicated region
    $region2: #{tpu_custom_call.1} parent=1 // pred_check
      _
    $region3: #{tpu_custom_call.1} parent=1 // pred_check_branch
      %14 = sbr.rel (0) target = $region5
    $region4: #{tpu_custom_call.1} parent=1 // pred_region
      %s16 = ssub.s32 768, 768
      %17 = vsyncadd [#allocation3], %s16
      %s18 = sshll.u32 [#allocation2], 4
      %s19 = int_to_ptr.vmem [resolvable:$true] %s18
      %24 = dma.hbm_to_vmem [thread:$0]  %s0, 768, %s19, [#allocation3], 192, 192, 12
    $region5: #{tpu_custom_call.1} parent=1 // pred_fallthru
      _
    // Predicated region
    $region6: #{tpu_custom_call.1} parent=1 // pred_check
      _
    $region7: #{tpu_custom_call.1} parent=1 // pred_check_branch
      %26 = sbr.rel (0) target = $region9
    $region8: #{tpu_custom_call.1} parent=1 // pred_region
      %s28 = ssub.s32 3072, 3072
      %29 = vsyncadd [#allocation6], %s28
      %s30 = sshll.u32 [#allocation5], 4
      %s31 = int_to_ptr.vmem [resolvable:$true] %s30
      %36 = dma.hbm_to_vmem [thread:$0]  %s1, 3072, %s31, [#allocation6], 64, 64, 4
    $region9: #{tpu_custom_call.1} parent=1 // pred_fallthru
      _
    // Predicated region
    $region10: #{tpu_custom_call.1} parent=1 // pred_check
      _
    $region11: #{tpu_custom_call.1} parent=1 // pred_check_branch
      %38 = sbr.rel (0) target = $region13
    $region12: #{tpu_custom_call.1} parent=1 // pred_region
      _
    $region13: #{tpu_custom_call.1} parent=1 // pred_fallthru
      _
    // Predicated region
    $region14: #{tpu_custom_call.1} parent=1 // pred_check
      _
    $region15: #{tpu_custom_call.1} parent=1 // pred_check_branch
      %40 = sbr.rel (0) target = $region17
    $region16: #{tpu_custom_call.1} parent=1 // pred_region
      %s42 = ssub.s32 3072, 3072
      %43 = vsyncadd [#allocation6], %s42
      %s44 = sshll.u32 [#allocation7], 4
      %s45 = int_to_ptr.vmem [resolvable:$true] %s44
      %50 = dma.hbm_to_vmem [thread:$0]  %s3, 3072, %s45, [#allocation6], 64, 64, 4
    $region17: #{tpu_custom_call.1} parent=1 // pred_fallthru
      _
    // Predicated region
    $region18: #{tpu_custom_call.1} parent=1 // pred_check
      _
    $region19: #{tpu_custom_call.1} parent=1 // pred_check_branch
      %52 = sbr.rel (0) target = $region21
    $region20: #{tpu_custom_call.1} parent=1 // pred_region
      _
    $region21: #{tpu_custom_call.1} parent=1 // pred_fallthru
      _
    // Predicated region
    $region22: #{tpu_custom_call.1} parent=1 // pred_check
      _
    $region23: #{tpu_custom_call.1} parent=1 // pred_check_branch
      %54 = sbr.rel (0) target = $region25
    $region24: #{tpu_custom_call.1} parent=1 // pred_region
      %55 = dma.done [#allocation3], 768
    $region25: #{tpu_custom_call.1} parent=1 // pred_fallthru
      _
    // Predicated region
    $region26: #{tpu_custom_call.1} parent=1 // pred_check
      _
    $region27: #{tpu_custom_call.1} parent=1 // pred_check_branch
      %57 = sbr.rel (0) target = $region29
    $region28: #{tpu_custom_call.1} parent=1 // pred_region
      %58 = dma.done [#allocation6], 3072
    $region29: #{tpu_custom_call.1} parent=1 // pred_fallthru
      _
    // Predicated region
    $region30: #{tpu_custom_call.1} parent=1 // pred_check
      _
    $region31: #{tpu_custom_call.1} parent=1 // pred_check_branch
      %60 = sbr.rel (0) target = $region33
    $region32: #{tpu_custom_call.1} parent=1 // pred_region
      %61 = dma.done [#allocation6], 3072
    $region33: #{tpu_custom_call.1} parent=1 // pred_fallthru
      _
    %v63 = vld [vmem:[#allocation2] sm:$0xff]
    %v64 = vld [vmem:[#allocation2 + $0x8] sm:$0xf]
    %v65 = vld [vmem:[#allocation2 + $0xc] sm:$0xff]
    %v66 = vld [vmem:[#allocation2 + $0x14] sm:$0xf]
    %v67 = vld [vmem:[#allocation2 + $0x18] sm:$0xff]
    %v68 = vld [vmem:[#allocation2 + $0x20] sm:$0xf]
    %v69 = vld [vmem:[#allocation2 + $0x24] sm:$0xff]
    %v70 = vld [vmem:[#allocation2 + $0x2c] sm:$0xf]
    %v71 = vld [vmem:[#allocation5] sm:$0xf]
    %v72 = vld [vmem:[#allocation5 + $0x4] sm:$0xf]
    %v73 = vld [vmem:[#allocation5 + $0x8] sm:$0xf]
    %v74 = vld [vmem:[#allocation5 + $0xc] sm:$0xf]
    %v75 = vld [vmem:[#allocation5 + $0x10] sm:$0xf]
    %v76 = vld [vmem:[#allocation5 + $0x14] sm:$0xf]
    %v77 = vld [vmem:[#allocation5 + $0x18] sm:$0xf]
    %v78 = vld [vmem:[#allocation5 + $0x1c] sm:$0xf]
    %v79 = vld [vmem:[#allocation5 + $0x20] sm:$0xf]
    %v80 = vld [vmem:[#allocation5 + $0x24] sm:$0xf]
    %v81 = vld [vmem:[#allocation5 + $0x28] sm:$0xf]
    %v82 = vld [vmem:[#allocation5 + $0x2c] sm:$0xf]
    %v83 = vld [vmem:[#allocation5 + $0x30] sm:$0xf]
    %v84 = vld [vmem:[#allocation5 + $0x34] sm:$0xf]
    %v85 = vld [vmem:[#allocation5 + $0x38] sm:$0xf]
    %v86 = vld [vmem:[#allocation5 + $0x3c] sm:$0xf]
    %v87 = vld [vmem:[#allocation5 + $0x40] sm:$0xf]
    %v88 = vld [vmem:[#allocation5 + $0x44] sm:$0xf]
    %v89 = vld [vmem:[#allocation5 + $0x48] sm:$0xf]
    %v90 = vld [vmem:[#allocation5 + $0x4c] sm:$0xf]
    %v91 = vld [vmem:[#allocation5 + $0x50] sm:$0xf]
    %v92 = vld [vmem:[#allocation5 + $0x54] sm:$0xf]
    %v93 = vld [vmem:[#allocation5 + $0x58] sm:$0xf]
    %v94 = vld [vmem:[#allocation5 + $0x5c] sm:$0xf]
    %v95 = vld [vmem:[#allocation5 + $0x60] sm:$0xf]
    %v96 = vld [vmem:[#allocation5 + $0x64] sm:$0xf]
    %v97 = vld [vmem:[#allocation5 + $0x68] sm:$0xf]
    %v98 = vld [vmem:[#allocation5 + $0x6c] sm:$0xf]
    %v99 = vld [vmem:[#allocation5 + $0x70] sm:$0xf]
    %v100 = vld [vmem:[#allocation5 + $0x74] sm:$0xf]
    %v101 = vld [vmem:[#allocation5 + $0x78] sm:$0xf]
    %v102 = vld [vmem:[#allocation5 + $0x7c] sm:$0xf]
    %v103 = vld [vmem:[#allocation5 + $0x80] sm:$0xf]
    %v104 = vld [vmem:[#allocation5 + $0x84] sm:$0xf]
    %v105 = vld [vmem:[#allocation5 + $0x88] sm:$0xf]
    %v106 = vld [vmem:[#allocation5 + $0x8c] sm:$0xf]
    %v107 = vld [vmem:[#allocation5 + $0x90] sm:$0xf]
    %v108 = vld [vmem:[#allocation5 + $0x94] sm:$0xf]
    %v109 = vld [vmem:[#allocation5 + $0x98] sm:$0xf]
    %v110 = vld [vmem:[#allocation5 + $0x9c] sm:$0xf]
    %v111 = vld [vmem:[#allocation5 + $0xa0] sm:$0xf]
    %v112 = vld [vmem:[#allocation5 + $0xa4] sm:$0xf]
    %v113 = vld [vmem:[#allocation5 + $0xa8] sm:$0xf]
    %v114 = vld [vmem:[#allocation5 + $0xac] sm:$0xf]
    %v115 = vld [vmem:[#allocation5 + $0xb0] sm:$0xf]
    %v116 = vld [vmem:[#allocation5 + $0xb4] sm:$0xf]
    %v117 = vld [vmem:[#allocation5 + $0xb8] sm:$0xf]
    %v118 = vld [vmem:[#allocation5 + $0xbc] sm:$0xf]
    %v119 = vld [vmem:[%s2] sm:$0x1]
    %v121 = vlaneseq
    %v122 = vshrl.u32 %v121, 7
    %v123 = vsub.s32 0, %v122
    %v124 = vrot.slane %v119, %v123
    %v134 = vunpack.c.l.b16 %v63
    %v135 = vunpack.c.h.b16 %v63
    %v136 = vunpack.c.l.b16 %v64
    %v137 = vunpack.c.l.b16 %v65
    %v138 = vunpack.c.h.b16 %v65
    %v139 = vunpack.c.l.b16 %v66
    %v140 = vunpack.c.l.b16 %v67
    %v141 = vunpack.c.h.b16 %v67
    %v142 = vunpack.c.l.b16 %v68
    %v143 = vunpack.c.l.b16 %v69
    %v144 = vunpack.c.h.b16 %v69
    %v145 = vunpack.c.l.b16 %v70
    %v146 = vpack.c.b16 %v137, %v134
    %v147 = vpack.c.b16 %v138, %v135
    %v148 = vpack.c.b16 %v139, %v136
    %v149 = vpack.c.b16 %v143, %v140
    %v150 = vpack.c.b16 %v144, %v141
    %v151 = vpack.c.b16 %v145, %v142
    %v206 = vunpack.c.l.b16 %v71
    %v207 = vunpack.c.l.b16 %v72
    %v208 = vunpack.c.l.b16 %v73
    %v209 = vunpack.c.l.b16 %v74
    %v210 = vunpack.c.l.b16 %v75
    %v211 = vunpack.c.l.b16 %v76
    %v212 = vunpack.c.l.b16 %v77
    %v213 = vunpack.c.l.b16 %v78
    %v214 = vunpack.c.l.b16 %v79
    %v215 = vunpack.c.l.b16 %v80
    %v216 = vunpack.c.l.b16 %v81
    %v217 = vunpack.c.l.b16 %v82
    %v218 = vunpack.c.l.b16 %v83
    %v219 = vunpack.c.l.b16 %v84
    %v220 = vunpack.c.l.b16 %v85
    %v221 = vunpack.c.l.b16 %v86
    %v222 = vunpack.c.l.b16 %v87
    %v223 = vunpack.c.l.b16 %v88
    %v224 = vunpack.c.l.b16 %v89
    %v225 = vunpack.c.l.b16 %v90
    %v226 = vunpack.c.l.b16 %v91
    %v227 = vunpack.c.l.b16 %v92
    %v228 = vunpack.c.l.b16 %v93
    %v229 = vunpack.c.l.b16 %v94
    %v230 = vunpack.c.l.b16 %v95
    %v231 = vunpack.c.l.b16 %v96
    %v232 = vunpack.c.l.b16 %v97
    %v233 = vunpack.c.l.b16 %v98
    %v234 = vunpack.c.l.b16 %v99
    %v235 = vunpack.c.l.b16 %v100
    %v236 = vunpack.c.l.b16 %v101
    %v237 = vunpack.c.l.b16 %v102
    %v238 = vunpack.c.l.b16 %v103
    %v239 = vunpack.c.l.b16 %v104
    %v240 = vunpack.c.l.b16 %v105
    %v241 = vunpack.c.l.b16 %v106
    %v242 = vunpack.c.l.b16 %v107
    %v243 = vunpack.c.l.b16 %v108
    %v244 = vunpack.c.l.b16 %v109
    %v245 = vunpack.c.l.b16 %v110
    %v246 = vunpack.c.l.b16 %v111
    %v247 = vunpack.c.l.b16 %v112
    %v248 = vunpack.c.l.b16 %v113
    %v249 = vunpack.c.l.b16 %v114
    %v250 = vunpack.c.l.b16 %v115
    %v251 = vunpack.c.l.b16 %v116
    %v252 = vunpack.c.l.b16 %v117
    %v253 = vunpack.c.l.b16 %v118
    %v254 = vpack.c.b16 %v207, %v206
    %v255 = vpack.c.b16 %v209, %v208
    %v256 = vpack.c.b16 %v211, %v210
    %v257 = vpack.c.b16 %v213, %v212
    %v258 = vpack.c.b16 %v215, %v214
    %v259 = vpack.c.b16 %v217, %v216
    %v260 = vpack.c.b16 %v219, %v218
    %v261 = vpack.c.b16 %v221, %v220
    %v262 = vpack.c.b16 %v223, %v222
    %v263 = vpack.c.b16 %v225, %v224
    %v264 = vpack.c.b16 %v227, %v226
    %v265 = vpack.c.b16 %v229, %v228
    %v266 = vpack.c.b16 %v231, %v230
    %v267 = vpack.c.b16 %v233, %v232
    %v268 = vpack.c.b16 %v235, %v234
    %v269 = vpack.c.b16 %v237, %v236
    %v270 = vpack.c.b16 %v239, %v238
    %v271 = vpack.c.b16 %v241, %v240
    %v272 = vpack.c.b16 %v243, %v242
    %v273 = vpack.c.b16 %v245, %v244
    %v274 = vpack.c.b16 %v247, %v246
    %v275 = vpack.c.b16 %v249, %v248
    %v276 = vpack.c.b16 %v251, %v250
    %v277 = vpack.c.b16 %v253, %v252
    %302 = vmatprep.subr.bf16.mxu0 0
    %303 = vmatpush1.bf16.msra.mxu0 %v254
    %304 = vmatprep.subr.bf16.mxu0 0
    %305 = vmatpush1.bf16.msra.mxu0 %v255
    %306 = vmatprep.subr.bf16.mxu0 0
    %307 = vmatpush1.bf16.msra.mxu0 %v256
    %308 = vmatprep.subr.bf16.mxu0 0
    %309 = vmatpush1.bf16.msra.mxu0 %v257
    %310 = vmatprep.subr.bf16.mxu0 0
    %311 = vmatpush1.bf16.msra.mxu0 %v258
    %312 = vmatprep.subr.bf16.mxu0 0
    %313 = vmatpush1.bf16.msra.mxu0 %v259
    %314 = vmatprep.subr.bf16.mxu0 0
    %315 = vmatpush1.bf16.msra.mxu0 %v260
    %316 = vmatprep.subr.bf16.mxu0 0
    %317 = vmatpush1.bf16.msra.mxu0 %v261
    %318 = vmatprep.subr.bf16.mxu0 0
    %319 = vmatpush1.bf16.msra.mxu0 %v262
    %320 = vmatprep.subr.bf16.mxu0 0
    %321 = vmatpush1.bf16.msra.mxu0 %v263
    %322 = vmatprep.subr.bf16.mxu0 0
    %323 = vmatpush1.bf16.msra.mxu0 %v264
    %324 = vmatprep.subr.bf16.mxu0 0
    %325 = vmatpush1.bf16.msra.mxu0 %v265
    %326 = vmatprep.subr.bf16.mxu0 0
    %327 = vmatpush1.bf16.msra.mxu0 %v266
    %328 = vmatprep.subr.bf16.mxu0 0
    %329 = vmatpush1.bf16.msra.mxu0 %v267
    %330 = vmatprep.subr.bf16.mxu0 0
    %331 = vmatpush1.bf16.msra.mxu0 %v268
    %332 = vmatprep.subr.bf16.mxu0 0
    %333 = vmatpush1.bf16.msra.mxu0 %v269
    %334 = vmatprep.mubr.bf16.mxu0 %v147
    %335 = vmatmul.mubr.bf16.gmra.mrb[0].mxu0 %v146
    %v336 = vpop.f32.mrb[0].mxu0
    %v337 = vadd.f32 %v124, %v336
    %v338 = vpop.f32.mrb[0].mxu0
    %v339 = vpop.f32.mrb[0].mxu0
    %v340 = vadd.f32 %v124, %v339
    %v341 = vpop.f32.mrb[0].mxu0
    %342 = vmatprep.mubr.bf16.mxu0 %v150
    %343 = vmatmul.mubr.bf16.gmra.mrb[0].mxu0 %v149
    %v344 = vpop.f32.mrb[0].mxu0
    %v345 = vadd.f32 %v124, %v344
    %v346 = vpop.f32.mrb[0].mxu0
    %v347 = vpop.f32.mrb[0].mxu0
    %v348 = vadd.f32 %v124, %v347
    %v349 = vpop.f32.mrb[0].mxu0
    %350 = vdwg.mxu0
    %351 = vmatprep.subr.bf16.mxu0 0
    %352 = vmatpush1.bf16.msra.mxu0 %v270
    %353 = vmatprep.subr.bf16.mxu0 0
    %354 = vmatpush1.bf16.msra.mxu0 %v271
    %355 = vmatprep.subr.bf16.mxu0 0
    %356 = vmatpush1.bf16.msra.mxu0 %v272
    %357 = vmatprep.subr.bf16.mxu0 0
    %358 = vmatpush1.bf16.msra.mxu0 %v273
    %359 = vmatprep.subr.bf16.mxu0 0
    %360 = vmatpush1.bf16.msra.mxu0 %v274
    %361 = vmatprep.subr.bf16.mxu0 0
    %362 = vmatpush1.bf16.msra.mxu0 %v275
    %363 = vmatprep.subr.bf16.mxu0 0
    %364 = vmatpush1.bf16.msra.mxu0 %v276
    %365 = vmatprep.subr.bf16.mxu0 0
    %366 = vmatpush1.bf16.msra.mxu0 %v277
    %367 = vmatprep.subr.bf16.mxu0 0
    %368 = vmatpush1.bf16.msra.mxu0 0
    %369 = vmatprep.subr.bf16.mxu0 0
    %370 = vmatpush1.bf16.msra.mxu0 0
    %371 = vmatprep.subr.bf16.mxu0 0
    %372 = vmatpush1.bf16.msra.mxu0 0
    %373 = vmatprep.subr.bf16.mxu0 0
    %374 = vmatpush1.bf16.msra.mxu0 0
    %375 = vmatprep.subr.bf16.mxu0 0
    %376 = vmatpush1.bf16.msra.mxu0 0
    %377 = vmatprep.subr.bf16.mxu0 0
    %378 = vmatpush1.bf16.msra.mxu0 0
    %379 = vmatprep.subr.bf16.mxu0 0
    %380 = vmatpush1.bf16.msra.mxu0 0
    %381 = vmatprep.subr.bf16.mxu0 0
    %382 = vmatpush1.bf16.msra.mxu0 0
    %383 = vmatprep.mubr.bf16.mxu0 0
    %384 = vmatmul.mubr.bf16.gmra.mrb[0].mxu0 %v148
    %v385 = vpop.f32.mrb[0].mxu0
    %v386 = vadd.f32 %v337, %v385
    %v387 = vpop.f32.mrb[0].mxu0
    %v388 = vpop.f32.mrb[0].mxu0
    %v389 = vadd.f32 %v340, %v388
    %v390 = vpop.f32.mrb[0].mxu0
    %391 = vmatprep.mubr.bf16.mxu0 0
    %392 = vmatmul.mubr.bf16.gmra.mrb[0].mxu0 %v151
    %v393 = vpop.f32.mrb[0].mxu0
    %v394 = vadd.f32 %v345, %v393
    %v395 = vpop.f32.mrb[0].mxu0
    %v396 = vpop.f32.mrb[0].mxu0
    %v397 = vadd.f32 %v348, %v396
    %v398 = vpop.f32.mrb[0].mxu0
    %399 = vdwg.mxu0
    %v400 = vmax.f32 %v386, 0.0
    %v401 = vmax.f32 %v389, 0.0
    %v402 = vmax.f32 %v394, 0.0
    %v403 = vmax.f32 %v397, 0.0
    %v404 = vlaneseq
    %v405 = vshrl.u32 %v404, 7
    %v406 = vadd.s32 %v405, 8
    %v407 = vadd.s32 %v405, 16
    %v408 = vadd.s32 %v405, 24
    %vm409 = vcmp.lt.s32.totalorder %v405, 0
    %v410 = vsub.s32 0, %v405
    %v411 = vsel %vm409, %v410, %v405
    %v412 = vshrl.u32 %v411, 4
    %v413 = vand.u32 %v411, 15
    %v414 = vsub.s32 0, %v413
    %v415 = vsel %vm409, %v414, %v413
    %vm416 = vcmp.lt.s32.totalorder %v406, 0
    %v417 = vsub.s32 0, %v406
    %v418 = vsel %vm416, %v417, %v406
    %v419 = vshrl.u32 %v418, 4
    %v420 = vand.u32 %v418, 15
    %v421 = vsub.s32 0, %v420
    %v422 = vsel %vm416, %v421, %v420
    %vm423 = vcmp.lt.s32.totalorder %v407, 0
    %v424 = vsub.s32 0, %v407
    %v425 = vsel %vm423, %v424, %v407
    %v426 = vshrl.u32 %v425, 4
    %v427 = vand.u32 %v425, 15
    %v428 = vsub.s32 0, %v427
    %v429 = vsel %vm423, %v428, %v427
    %vm430 = vcmp.lt.s32.totalorder %v408, 0
    %v431 = vsub.s32 0, %v408
    %v432 = vsel %vm430, %v431, %v408
    %v433 = vshrl.u32 %v432, 4
    %v434 = vand.u32 %v432, 15
    %v435 = vsub.s32 0, %v434
    %v436 = vsel %vm430, %v435, %v434
    %vm437 = vcmp.ne.s32.totalorder %v415, 0
    %vm438 = vcmp.ne.s32.totalorder %v422, 0
    %vm439 = vcmp.ne.s32.totalorder %v429, 0
    %vm440 = vcmp.ne.s32.totalorder %v436, 0
    %vm441 = vcmp.lt.s32.totalorder %v415, 0
    %vm442 = vcmp.lt.s32.totalorder %v422, 0
    %vm443 = vcmp.lt.s32.totalorder %v429, 0
    %vm444 = vcmp.lt.s32.totalorder %v436, 0
    %vm445 = vmand %vm441, %vm437
    %vm446 = vmand %vm442, %vm438
    %vm447 = vmand %vm443, %vm439
    %vm448 = vmand %vm444, %vm440
    %v449 = vadd.s32 %v415, 16
    %v450 = vadd.s32 %v422, 16
    %v451 = vadd.s32 %v429, 16
    %v452 = vadd.s32 %v436, 16
    %v453 = vsel %vm445, %v449, %v415
    %v454 = vsel %vm446, %v450, %v422
    %v455 = vsel %vm447, %v451, %v429
    %v456 = vsel %vm448, %v452, %v436
    %vm461 = vcmask 1040384
    %v462 = vrot.slane %v400, 7
    %v463 = vrot.slane %v401, 7
    %v464 = vsel %vm461, %v462, %v463
    %v465 = vrot.slane %v402, 7
    %v466 = vsel %vm461, %v463, %v465
    %v467 = vrot.slane %v403, 7
    %v468 = vsel %vm461, %v465, %v467
    %v473 = vsel %vm461, 0.0, %v462
    %vm474 = vcmask 1046528
    %v475 = vrot.slane %v400, 1
    %v476 = vrot.slane %v401, 1
    %v477 = vsel %vm474, %v475, %v476
    %v478 = vrot.slane %v402, 1
    %v479 = vsel %vm474, %v476, %v478
    %v480 = vrot.slane %v403, 1
    %v481 = vsel %vm474, %v478, %v480
    %v486 = vsel %vm474, %v480, 0.0
    %vm487 = vcmp.eq.s32.totalorder %v453, 0
    %vm488 = vcmp.eq.s32.totalorder %v454, 0
    %vm489 = vcmp.eq.s32.totalorder %v455, 0
    %vm490 = vcmp.eq.s32.totalorder %v456, 0
    %v491 = vsel %vm487, 0.0, %v473
    %v492 = vsel %vm488, 0.0, %v464
    %v493 = vsel %vm489, 0.0, %v466
    %v494 = vsel %vm490, 0.0, %v468
    %vm495 = vcmp.eq.s32.totalorder %v453, 15
    %vm496 = vcmp.eq.s32.totalorder %v454, 15
    %vm497 = vcmp.eq.s32.totalorder %v455, 15
    %vm498 = vcmp.eq.s32.totalorder %v456, 15
    %v499 = vsel %vm495, 0.0, %v477
    %v500 = vsel %vm496, 0.0, %v479
    %v501 = vsel %vm497, 0.0, %v481
    %v502 = vsel %vm498, 0.0, %v486
    %v503 = vpack.c.bf16 %v492, %v491
    %v504 = vpack.c.bf16 %v401, %v400
    %v505 = vpack.c.bf16 %v500, %v499
    %v506 = vpack.c.bf16 %v494, %v493
    %v507 = vpack.c.bf16 %v403, %v402
    %v508 = vpack.c.bf16 %v502, %v501
    %v509 = vld [vmem:[#allocation7] sm:$0xf]
    %v510 = vld [vmem:[#allocation7 + $0x4] sm:$0xf]
    %v511 = vld [vmem:[#allocation7 + $0x8] sm:$0xf]
    %v512 = vld [vmem:[#allocation7 + $0xc] sm:$0xf]
    %v513 = vld [vmem:[#allocation7 + $0x10] sm:$0xf]
    %v514 = vld [vmem:[#allocation7 + $0x14] sm:$0xf]
    %v515 = vld [vmem:[#allocation7 + $0x18] sm:$0xf]
    %v516 = vld [vmem:[#allocation7 + $0x1c] sm:$0xf]
    %v517 = vld [vmem:[#allocation7 + $0x20] sm:$0xf]
    %v518 = vld [vmem:[#allocation7 + $0x24] sm:$0xf]
    %v519 = vld [vmem:[#allocation7 + $0x28] sm:$0xf]
    %v520 = vld [vmem:[#allocation7 + $0x2c] sm:$0xf]
    %v521 = vld [vmem:[#allocation7 + $0x30] sm:$0xf]
    %v522 = vld [vmem:[#allocation7 + $0x34] sm:$0xf]
    %v523 = vld [vmem:[#allocation7 + $0x38] sm:$0xf]
    %v524 = vld [vmem:[#allocation7 + $0x3c] sm:$0xf]
    %v525 = vld [vmem:[#allocation7 + $0x40] sm:$0xf]
    %v526 = vld [vmem:[#allocation7 + $0x44] sm:$0xf]
    %v527 = vld [vmem:[#allocation7 + $0x48] sm:$0xf]
    %v528 = vld [vmem:[#allocation7 + $0x4c] sm:$0xf]
    %v529 = vld [vmem:[#allocation7 + $0x50] sm:$0xf]
    %v530 = vld [vmem:[#allocation7 + $0x54] sm:$0xf]
    %v531 = vld [vmem:[#allocation7 + $0x58] sm:$0xf]
    %v532 = vld [vmem:[#allocation7 + $0x5c] sm:$0xf]
    %v533 = vld [vmem:[#allocation7 + $0x60] sm:$0xf]
    %v534 = vld [vmem:[#allocation7 + $0x64] sm:$0xf]
    %v535 = vld [vmem:[#allocation7 + $0x68] sm:$0xf]
    %v536 = vld [vmem:[#allocation7 + $0x6c] sm:$0xf]
    %v537 = vld [vmem:[#allocation7 + $0x70] sm:$0xf]
    %v538 = vld [vmem:[#allocation7 + $0x74] sm:$0xf]
    %v539 = vld [vmem:[#allocation7 + $0x78] sm:$0xf]
    %v540 = vld [vmem:[#allocation7 + $0x7c] sm:$0xf]
    %v541 = vld [vmem:[#allocation7 + $0x80] sm:$0xf]
    %v542 = vld [vmem:[#allocation7 + $0x84] sm:$0xf]
    %v543 = vld [vmem:[#allocation7 + $0x88] sm:$0xf]
    %v544 = vld [vmem:[#allocation7 + $0x8c] sm:$0xf]
    %v545 = vld [vmem:[#allocation7 + $0x90] sm:$0xf]
    %v546 = vld [vmem:[#allocation7 + $0x94] sm:$0xf]
    %v547 = vld [vmem:[#allocation7 + $0x98] sm:$0xf]
    %v548 = vld [vmem:[#allocation7 + $0x9c] sm:$0xf]
    %v549 = vld [vmem:[#allocation7 + $0xa0] sm:$0xf]
    %v550 = vld [vmem:[#allocation7 + $0xa4] sm:$0xf]
    %v551 = vld [vmem:[#allocation7 + $0xa8] sm:$0xf]
    %v552 = vld [vmem:[#allocation7 + $0xac] sm:$0xf]
    %v553 = vld [vmem:[#allocation7 + $0xb0] sm:$0xf]
    %v554 = vld [vmem:[#allocation7 + $0xb4] sm:$0xf]
    %v555 = vld [vmem:[#allocation7 + $0xb8] sm:$0xf]
    %v556 = vld [vmem:[#allocation7 + $0xbc] sm:$0xf]
    %v557 = vrot.slane %v63, 4
    %v558 = vrot.slane %v65, 4
    %v559 = vrot.slane %v67, 4
    %v560 = vrot.slane %v69, 4
    %v565 = vunpack.c.l.bf16 %v557
    %v566 = vunpack.c.l.bf16 %v558
    %v567 = vunpack.c.l.bf16 %v559
    %v568 = vunpack.c.l.bf16 %v560
    %v569 = vld [vmem:[%s4] sm:$0x1]
    %v571 = vlaneseq
    %v572 = vshrl.u32 %v571, 7
    %v573 = vsub.s32 0, %v572
    %v574 = vrot.slane %v569, %v573
    %v624 = vunpack.c.l.b16 %v509
    %v625 = vunpack.c.l.b16 %v510
    %v626 = vunpack.c.l.b16 %v511
    %v627 = vunpack.c.l.b16 %v512
    %v628 = vunpack.c.l.b16 %v513
    %v629 = vunpack.c.l.b16 %v514
    %v630 = vunpack.c.l.b16 %v515
    %v631 = vunpack.c.l.b16 %v516
    %v632 = vunpack.c.l.b16 %v517
    %v633 = vunpack.c.l.b16 %v518
    %v634 = vunpack.c.l.b16 %v519
    %v635 = vunpack.c.l.b16 %v520
    %v636 = vunpack.c.l.b16 %v521
    %v637 = vunpack.c.l.b16 %v522
    %v638 = vunpack.c.l.b16 %v523
    %v639 = vunpack.c.l.b16 %v524
    %v640 = vunpack.c.l.b16 %v525
    %v641 = vunpack.c.l.b16 %v526
    %v642 = vunpack.c.l.b16 %v527
    %v643 = vunpack.c.l.b16 %v528
    %v644 = vunpack.c.l.b16 %v529
    %v645 = vunpack.c.l.b16 %v530
    %v646 = vunpack.c.l.b16 %v531
    %v647 = vunpack.c.l.b16 %v532
    %v648 = vunpack.c.l.b16 %v533
    %v649 = vunpack.c.l.b16 %v534
    %v650 = vunpack.c.l.b16 %v535
    %v651 = vunpack.c.l.b16 %v536
    %v652 = vunpack.c.l.b16 %v537
    %v653 = vunpack.c.l.b16 %v538
    %v654 = vunpack.c.l.b16 %v539
    %v655 = vunpack.c.l.b16 %v540
    %v656 = vunpack.c.l.b16 %v541
    %v657 = vunpack.c.l.b16 %v542
    %v658 = vunpack.c.l.b16 %v543
    %v659 = vunpack.c.l.b16 %v544
    %v660 = vunpack.c.l.b16 %v545
    %v661 = vunpack.c.l.b16 %v546
    %v662 = vunpack.c.l.b16 %v547
    %v663 = vunpack.c.l.b16 %v548
    %v664 = vunpack.c.l.b16 %v549
    %v665 = vunpack.c.l.b16 %v550
    %v666 = vunpack.c.l.b16 %v551
    %v667 = vunpack.c.l.b16 %v552
    %v668 = vunpack.c.l.b16 %v553
    %v669 = vunpack.c.l.b16 %v554
    %v670 = vunpack.c.l.b16 %v555
    %v671 = vunpack.c.l.b16 %v556
    %v672 = vpack.c.b16 %v625, %v624
    %v673 = vpack.c.b16 %v627, %v626
    %v674 = vpack.c.b16 %v629, %v628
    %v675 = vpack.c.b16 %v631, %v630
    %v676 = vpack.c.b16 %v633, %v632
    %v677 = vpack.c.b16 %v635, %v634
    %v678 = vpack.c.b16 %v637, %v636
    %v679 = vpack.c.b16 %v639, %v638
    %v680 = vpack.c.b16 %v641, %v640
    %v681 = vpack.c.b16 %v643, %v642
    %v682 = vpack.c.b16 %v645, %v644
    %v683 = vpack.c.b16 %v647, %v646
    %v684 = vpack.c.b16 %v649, %v648
    %v685 = vpack.c.b16 %v651, %v650
    %v686 = vpack.c.b16 %v653, %v652
    %v687 = vpack.c.b16 %v655, %v654
    %v688 = vpack.c.b16 %v657, %v656
    %v689 = vpack.c.b16 %v659, %v658
    %v690 = vpack.c.b16 %v661, %v660
    %v691 = vpack.c.b16 %v663, %v662
    %v692 = vpack.c.b16 %v665, %v664
    %v693 = vpack.c.b16 %v667, %v666
    %v694 = vpack.c.b16 %v669, %v668
    %v695 = vpack.c.b16 %v671, %v670
    %720 = vmatprep.subr.bf16.mxu0 0
    %721 = vmatpush1.bf16.msra.mxu0 %v672
    %722 = vmatprep.subr.bf16.mxu0 0
    %723 = vmatpush1.bf16.msra.mxu0 %v673
    %724 = vmatprep.subr.bf16.mxu0 0
    %725 = vmatpush1.bf16.msra.mxu0 %v674
    %726 = vmatprep.subr.bf16.mxu0 0
    %727 = vmatpush1.bf16.msra.mxu0 %v675
    %728 = vmatprep.subr.bf16.mxu0 0
    %729 = vmatpush1.bf16.msra.mxu0 %v676
    %730 = vmatprep.subr.bf16.mxu0 0
    %731 = vmatpush1.bf16.msra.mxu0 %v677
    %732 = vmatprep.subr.bf16.mxu0 0
    %733 = vmatpush1.bf16.msra.mxu0 %v678
    %734 = vmatprep.subr.bf16.mxu0 0
    %735 = vmatpush1.bf16.msra.mxu0 %v679
    %736 = vmatprep.subr.bf16.mxu0 0
    %737 = vmatpush1.bf16.msra.mxu0 %v680
    %738 = vmatprep.subr.bf16.mxu0 0
    %739 = vmatpush1.bf16.msra.mxu0 %v681
    %740 = vmatprep.subr.bf16.mxu0 0
    %741 = vmatpush1.bf16.msra.mxu0 %v682
    %742 = vmatprep.subr.bf16.mxu0 0
    %743 = vmatpush1.bf16.msra.mxu0 %v683
    %744 = vmatprep.subr.bf16.mxu0 0
    %745 = vmatpush1.bf16.msra.mxu0 %v684
    %746 = vmatprep.subr.bf16.mxu0 0
    %747 = vmatpush1.bf16.msra.mxu0 %v685
    %748 = vmatprep.subr.bf16.mxu0 0
    %749 = vmatpush1.bf16.msra.mxu0 %v686
    %750 = vmatprep.subr.bf16.mxu0 0
    %751 = vmatpush1.bf16.msra.mxu0 %v687
    %752 = vmatprep.mubr.bf16.mxu0 %v504
    %753 = vmatmul.mubr.bf16.gmra.mrb[0].mxu0 %v503
    %v754 = vpop.f32.mrb[0].mxu0
    %v755 = vadd.f32 %v574, %v754
    %v756 = vpop.f32.mrb[0].mxu0
    %v757 = vpop.f32.mrb[0].mxu0
    %v758 = vadd.f32 %v574, %v757
    %v759 = vpop.f32.mrb[0].mxu0
    %760 = vmatprep.mubr.bf16.mxu0 %v507
    %761 = vmatmul.mubr.bf16.gmra.mrb[0].mxu0 %v506
    %v762 = vpop.f32.mrb[0].mxu0
    %v763 = vadd.f32 %v574, %v762
    %v764 = vpop.f32.mrb[0].mxu0
    %v765 = vpop.f32.mrb[0].mxu0
    %v766 = vadd.f32 %v574, %v765
    %v767 = vpop.f32.mrb[0].mxu0
    %768 = vdwg.mxu0
    %769 = vmatprep.subr.bf16.mxu0 0
    %770 = vmatpush1.bf16.msra.mxu0 %v688
    %771 = vmatprep.subr.bf16.mxu0 0
    %772 = vmatpush1.bf16.msra.mxu0 %v689
    %773 = vmatprep.subr.bf16.mxu0 0
    %774 = vmatpush1.bf16.msra.mxu0 %v690
    %775 = vmatprep.subr.bf16.mxu0 0
    %776 = vmatpush1.bf16.msra.mxu0 %v691
    %777 = vmatprep.subr.bf16.mxu0 0
    %778 = vmatpush1.bf16.msra.mxu0 %v692
    %779 = vmatprep.subr.bf16.mxu0 0
    %780 = vmatpush1.bf16.msra.mxu0 %v693
    %781 = vmatprep.subr.bf16.mxu0 0
    %782 = vmatpush1.bf16.msra.mxu0 %v694
    %783 = vmatprep.subr.bf16.mxu0 0
    %784 = vmatpush1.bf16.msra.mxu0 %v695
    %785 = vmatprep.subr.bf16.mxu0 0
    %786 = vmatpush1.bf16.msra.mxu0 0
    %787 = vmatprep.subr.bf16.mxu0 0
    %788 = vmatpush1.bf16.msra.mxu0 0
    %789 = vmatprep.subr.bf16.mxu0 0
    %790 = vmatpush1.bf16.msra.mxu0 0
    %791 = vmatprep.subr.bf16.mxu0 0
    %792 = vmatpush1.bf16.msra.mxu0 0
    %793 = vmatprep.subr.bf16.mxu0 0
    %794 = vmatpush1.bf16.msra.mxu0 0
    %795 = vmatprep.subr.bf16.mxu0 0
    %796 = vmatpush1.bf16.msra.mxu0 0
    %797 = vmatprep.subr.bf16.mxu0 0
    %798 = vmatpush1.bf16.msra.mxu0 0
    %799 = vmatprep.subr.bf16.mxu0 0
    %800 = vmatpush1.bf16.msra.mxu0 0
    %801 = vmatprep.mubr.bf16.mxu0 0
    %802 = vmatmul.mubr.bf16.gmra.mrb[0].mxu0 %v505
    %v803 = vpop.f32.mrb[0].mxu0
    %v804 = vadd.f32 %v755, %v803
    %v805 = vpop.f32.mrb[0].mxu0
    %v806 = vpop.f32.mrb[0].mxu0
    %v807 = vadd.f32 %v758, %v806
    %v808 = vpop.f32.mrb[0].mxu0
    %809 = vmatprep.mubr.bf16.mxu0 0
    %810 = vmatmul.mubr.bf16.gmra.mrb[0].mxu0 %v508
    %v811 = vpop.f32.mrb[0].mxu0
    %v812 = vadd.f32 %v763, %v811
    %v813 = vpop.f32.mrb[0].mxu0
    %v814 = vpop.f32.mrb[0].mxu0
    %v815 = vadd.f32 %v766, %v814
    %v816 = vpop.f32.mrb[0].mxu0
    %817 = vdwg.mxu0
    %v818 = vadd.f32 %v804, %v565
    %v819 = vadd.f32 %v807, %v566
    %v820 = vadd.f32 %v812, %v567
    %v821 = vadd.f32 %v815, %v568
    %v822 = vmax.f32 %v818, 0.0
    %v823 = vmax.f32 %v819, 0.0
    %v824 = vmax.f32 %v820, 0.0
    %v825 = vmax.f32 %v821, 0.0
    %826 = vst [vmem:[#allocation8] sm:$0xff] %v822
    %827 = vst [vmem:[#allocation8 + $0x8] sm:$0xff] %v823
    %828 = vst [vmem:[#allocation8 + $0x10] sm:$0xff] %v824
    %829 = vst [vmem:[#allocation8 + $0x18] sm:$0xff] %v825
    // Predicated region
    $region34: #{tpu_custom_call.1} parent=1 // pred_check
      _
    $region35: #{tpu_custom_call.1} parent=1 // pred_check_branch
      %831 = sbr.rel (0) target = $region37
    $region36: #{tpu_custom_call.1} parent=1 // pred_region
      %s833 = ssub.s32 512, 512
      %834 = vsyncadd [#allocation4], %s833
      %s835 = sshll.u32 [#allocation8], 4
      %s836 = int_to_ptr.vmem [resolvable:$true] %s835
      %841 = dma.vmem_to_hbm [thread:$0]  %s836, 512, %s5, [#allocation4], 128, 128, 8
    $region37: #{tpu_custom_call.1} parent=1 // pred_fallthru
      _
    // Predicated region
    $region38: #{tpu_custom_call.1} parent=1 // pred_check
      _
    $region39: #{tpu_custom_call.1} parent=1 // pred_check_branch
      %843 = sbr.rel (0) target = $region41
    $region40: #{tpu_custom_call.1} parent=1 // pred_region
      %844 = dma.done [#allocation4], 512
    $region41: #{tpu_custom_call.1} parent=1 // pred_fallthru
      _
    %845 = vsyncpa [#allocation3], 1
    %846 = vsyncpa [#allocation6], 1
    %847 = vsyncpa [#allocation4], 1

</llo_original>
